<compile_context>
chip_gen: v7x
topology: tpu7x:2x2x1
jax: 0.10.0
libtpu: 0.0.40
codegen_flags: <defaults>
</compile_context>

<pallas_src>
import math
import jax
import jax.numpy as jnp
from jax.experimental import pallas as pl
from jax.experimental.pallas import tpu as pltpu


LANE = 128
SUBLANE = 8


def _round_up(x, m):
    return ((x + m - 1) // m) * m


def _res_classifier_kernel(x_ref, w1_ref, b1_ref, w2_ref, b2_ref, bn_ref, y_ref):
    # Both matmuls run back-to-back on the MXU with the intermediate kept on-chip
    # in f32 (accumulator precision), then written out in the I/O dtype.
    x = x_ref[...]
    h = jnp.dot(x, w1_ref[...], preferred_element_type=jnp.float32) + b1_ref[...]
    bn_ref[...] = h.astype(bn_ref.dtype)
    y = jnp.dot(h, w2_ref[...], preferred_element_type=jnp.float32) + b2_ref[...]
    y_ref[...] = y.astype(y_ref.dtype)


def _pick_batch_tile(B, F, BN, Cp, itemsize,
                     max_tile=1024, vmem_budget=24 * 1024 * 1024):
    """Largest batch tile (multiple of 8, <= max_tile) whose double-buffered
    x/bn/y tiles plus the resident weights fit a conservative VMEM budget."""
    weights_bytes = (F * BN + BN + BN * Cp + Cp) * itemsize
    tb = min(max_tile, _round_up(B, SUBLANE))
    tb = max(SUBLANE, _round_up(tb, SUBLANE))
    while tb > SUBLANE:
        per_tile = 2 * tb * (F + BN + Cp) * itemsize  # 2x = double buffering
        if weights_bytes + per_tile <= vmem_budget:
            break
        tb = max(SUBLANE, _round_up(tb // 2, SUBLANE))
    return tb


def res_classifier_forward(x, w1, b1, w2, b2, *, max_batch_tile=1024):
    """x: [B, feature_dim]; w1: [feature_dim, bottleneck]; b1: [1, bottleneck];
    w2: [bottleneck, class_num]; b2: [1, class_num].  Returns (bottleneck_act, logits)."""
    B, feature_dim = x.shape
    bottleneck_dim = w1.shape[1]
    class_num = w2.shape[1]
    dtype = x.dtype
    itemsize = jnp.dtype(dtype).itemsize

    # --- pad class dim to a lane-dense multiple of 128 (full-width stores) ---
    class_pad = _round_up(max(class_num, LANE), LANE)
    if class_pad != class_num:
        w2p = jnp.pad(w2, ((0, 0), (0, class_pad - class_num)))
        b2p = jnp.pad(b2, ((0, 0), (0, class_pad - class_num)))
    else:
        w2p, b2p = w2, b2

    # --- pick a batch tile and pad the batch so the grid divides evenly ---
    tb = _pick_batch_tile(B, feature_dim, bottleneck_dim, class_pad, itemsize,
                          max_tile=max_batch_tile)
    b_pad = _round_up(B, tb)
    xp = jnp.pad(x, ((0, b_pad - B), (0, 0))) if b_pad != B else x
    grid = (b_pad // tb,)

    flops = 2 * b_pad * (feature_dim * bottleneck_dim + bottleneck_dim * class_pad)
    bytes_accessed = itemsize * (
        b_pad * feature_dim                       # x in
        + feature_dim * bottleneck_dim + bottleneck_dim     # w1, b1
        + bottleneck_dim * class_pad + class_pad            # w2, b2
        + b_pad * (bottleneck_dim + class_pad))             # bn, y out

    bn, y = pl.pallas_call(
        _res_classifier_kernel,
        out_shape=(
            jax.ShapeDtypeStruct((b_pad, bottleneck_dim), dtype),
            jax.ShapeDtypeStruct((b_pad, class_pad), dtype),
        ),
        grid=grid,
        in_specs=[
            pl.BlockSpec((tb, feature_dim), lambda i: (i, 0)),           # x tile
            pl.BlockSpec((feature_dim, bottleneck_dim), lambda i: (0, 0)),  # w1 resident
            pl.BlockSpec((1, bottleneck_dim), lambda i: (0, 0)),            # b1 resident
            pl.BlockSpec((bottleneck_dim, class_pad), lambda i: (0, 0)),    # w2 resident
            pl.BlockSpec((1, class_pad), lambda i: (0, 0)),                 # b2 resident
        ],
        out_specs=(
            pl.BlockSpec((tb, bottleneck_dim), lambda i: (i, 0)),
            pl.BlockSpec((tb, class_pad), lambda i: (i, 0)),
        ),
        compiler_params=pltpu.CompilerParams(
            dimension_semantics=("parallel",),          # megacore split on v7x
            vmem_limit_bytes=48 * 1024 * 1024,          # fits all generations
        ),
        cost_estimate=pl.CostEstimate(
            flops=flops, transcendentals=0, bytes_accessed=bytes_accessed),
    )(xp, w1, b1, w2p, b2p)

    # Strip batch padding and class padding.
    return bn[:B], y[:B, :class_num]


def init_res_classifier_params(key, feature_dim, class_num, bottleneck_dim=256,
                               dtype=jnp.float32):
    """Deterministic init matching init_weights: Linear -> xavier_normal weight, zero bias."""
    k1, k2 = jax.random.split(key)
    # xavier_normal std = sqrt(2 / (fan_in + fan_out))
    std1 = math.sqrt(2.0 / (feature_dim + bottleneck_dim))
    std2 = math.sqrt(2.0 / (bottleneck_dim + class_num))
    # stored as (in, out) == PyTorch weight.T
    w1 = (jax.random.normal(k1, (feature_dim, bottleneck_dim)) * std1).astype(dtype)
    b1 = jnp.zeros((1, bottleneck_dim), dtype)
    w2 = (jax.random.normal(k2, (bottleneck_dim, class_num)) * std2).astype(dtype)
    b2 = jnp.zeros((1, class_num), dtype)
    return w1, b1, w2, b2


if __name__ == "__main__":
    key = jax.random.PRNGKey(0)
    kx, kp = jax.random.split(key)

    batch = 8
    feature_dim = 32
    bottleneck_dim = 256
    class_num = 10

    x = jax.random.normal(kx, (batch, feature_dim), dtype=jnp.float32)
    w1, b1, w2, b2 = init_res_classifier_params(
        kp, feature_dim, class_num, bottleneck_dim)

    bn, y = res_classifier_forward(x, w1, b1, w2, b2)
    jax.block_until_ready((bn, y))

    # Reference check against plain JAX
    bn_ref = x @ w1 + b1
    y_ref = bn_ref @ w2 + b2
    assert bn.shape == (batch, bottleneck_dim) and y.shape == (batch, class_num)
    assert jnp.allclose(bn, bn_ref, atol=1e-5, rtol=1e-5)
    assert jnp.allclose(y, y_ref, atol=1e-5, rtol=1e-5)

    # Also exercise a larger, non-tile-aligned batch to check tiling/padding paths.
    xb = jax.random.normal(kx, (1000, feature_dim), dtype=jnp.float32)
    bn2, y2 = res_classifier_forward(xb, w1, b1, w2, b2)
    jax.block_until_ready((bn2, y2))
    bn2_ref = xb @ w1 + b1
    y2_ref = bn2_ref @ w2 + b2
    assert bn2.shape == (1000, bottleneck_dim) and y2.shape == (1000, class_num)
    assert jnp.allclose(bn2, bn2_ref, atol=1e-4, rtol=1e-4)
    assert jnp.allclose(y2, y2_ref, atol=1e-4, rtol=1e-4)

    print("KERNEL_OK")
</pallas_src>

<mosaic_0001>
module attributes {stable_mosaic.version = 11 : i64} {
  func.func @_res_classifier_kernel(%arg0: i32, %arg1: memref<8x32xf32, #tpu.memory_space<vmem>>, %arg2: memref<32x256xf32, #tpu.memory_space<vmem>>, %arg3: memref<1x256xf32, #tpu.memory_space<vmem>>, %arg4: memref<256x128xf32, #tpu.memory_space<vmem>>, %arg5: memref<1x128xf32, #tpu.memory_space<vmem>>, %arg6: memref<8x256xf32, #tpu.memory_space<vmem>>, %arg7: memref<8x128xf32, #tpu.memory_space<vmem>>) attributes {dimension_semantics = [#tpu.dimension_semantics<parallel>], iteration_bounds = array<i64: 1>, scalar_prefetch = 0 : i64, scratch_operands = 0 : i64, tpu.core_type = #tpu.core_type<tc>, window_params = [{transform_indices = @transform_0, window_bounds = array<i64: 8, 32>}, {pipeline_mode = #tpu.pipeline_mode<synchronous>, transform_indices = @transform_1, window_bounds = array<i64: 32, 256>}, {pipeline_mode = #tpu.pipeline_mode<synchronous>, transform_indices = @transform_2, window_bounds = array<i64: 1, 256>}, {pipeline_mode = #tpu.pipeline_mode<synchronous>, transform_indices = @transform_3, window_bounds = array<i64: 256, 128>}, {pipeline_mode = #tpu.pipeline_mode<synchronous>, transform_indices = @transform_4, window_bounds = array<i64: 1, 128>}, {transform_indices = @transform_5, window_bounds = array<i64: 8, 256>}, {transform_indices = @transform_6, window_bounds = array<i64: 8, 128>}]} {
    %c0 = arith.constant 0 : index
    %c0_0 = arith.constant 0 : index
    %0 = vector.load %arg1[%c0, %c0_0] : memref<8x32xf32, #tpu.memory_space<vmem>>, vector<8x32xf32>
    %c0_1 = arith.constant 0 : index
    %c0_2 = arith.constant 0 : index
    %1 = vector.load %arg2[%c0_1, %c0_2] : memref<32x256xf32, #tpu.memory_space<vmem>>, vector<32x256xf32>
    %cst = arith.constant dense<0.000000e+00> : vector<8x256xf32>
    %2 = tpu.matmul %0, %1, %cst {dimension_numbers = #tpu.dot_dimension_numbers<[1], [0], [0], [1], [0, 0, 1, 1], [], []>} : vector<8x32xf32>, vector<32x256xf32>, vector<8x256xf32> -> vector<8x256xf32>
    %c0_3 = arith.constant 0 : index
    %c0_4 = arith.constant 0 : index
    %3 = vector.load %arg3[%c0_3, %c0_4] : memref<1x256xf32, #tpu.memory_space<vmem>>, vector<1x256xf32>
    %4 = vector.broadcast %3 : vector<1x256xf32> to vector<8x256xf32>
    %5 = arith.addf %2, %4 : vector<8x256xf32>
    %c0_5 = arith.constant 0 : index
    %c0_6 = arith.constant 0 : index
    %6 = vector.load %arg6[%c0_5, %c0_6] : memref<8x256xf32, #tpu.memory_space<vmem>>, vector<8x256xf32>
    tpu.vector_store %arg6[%c0_5, %c0_6], %5 {strides = array<i32>} : memref<8x256xf32, #tpu.memory_space<vmem>>, vector<8x256xf32>,
    %c0_7 = arith.constant 0 : index
    %c0_8 = arith.constant 0 : index
    %7 = vector.load %arg4[%c0_7, %c0_8] : memref<256x128xf32, #tpu.memory_space<vmem>>, vector<256x128xf32>
    %cst_9 = arith.constant dense<0.000000e+00> : vector<8x128xf32>
    %8 = tpu.matmul %5, %7, %cst_9 {dimension_numbers = #tpu.dot_dimension_numbers<[1], [0], [0], [1], [0, 0, 1, 1], [], []>} : vector<8x256xf32>, vector<256x128xf32>, vector<8x128xf32> -> vector<8x128xf32>
    %c0_10 = arith.constant 0 : index
    %c0_11 = arith.constant 0 : index
    %9 = vector.load %arg5[%c0_10, %c0_11] : memref<1x128xf32, #tpu.memory_space<vmem>>, vector<1x128xf32>
    %10 = vector.broadcast %9 : vector<1x128xf32> to vector<8x128xf32>
    %11 = arith.addf %8, %10 : vector<8x128xf32>
    %c0_12 = arith.constant 0 : index
    %c0_13 = arith.constant 0 : index
    %12 = vector.load %arg7[%c0_12, %c0_13] : memref<8x128xf32, #tpu.memory_space<vmem>>, vector<8x128xf32>
    tpu.vector_store %arg7[%c0_12, %c0_13], %11 {strides = array<i32>} : memref<8x128xf32, #tpu.memory_space<vmem>>, vector<8x128xf32>,
    return
  }
  func.func @transform_0(%arg0: i32) -> (i32, i32) {
    %c0_i32 = arith.constant 0 : i32
    %c0_i32_0 = arith.constant 0 : i32
    return %arg0, %c0_i32 : i32, i32
  }
  func.func @transform_1(%arg0: i32) -> (i32, i32) {
    %c0_i32 = arith.constant 0 : i32
    %c0_i32_0 = arith.constant 0 : i32
    %c0_i32_1 = arith.constant 0 : i32
    return %c0_i32, %c0_i32_0 : i32, i32
  }
  func.func @transform_2(%arg0: i32) -> (i32, i32) {
    %c0_i32 = arith.constant 0 : i32
    %c0_i32_0 = arith.constant 0 : i32
    %c0_i32_1 = arith.constant 0 : i32
    return %c0_i32, %c0_i32_0 : i32, i32
  }
  func.func @transform_3(%arg0: i32) -> (i32, i32) {
    %c0_i32 = arith.constant 0 : i32
    %c0_i32_0 = arith.constant 0 : i32
    %c0_i32_1 = arith.constant 0 : i32
    return %c0_i32, %c0_i32_0 : i32, i32
  }
  func.func @transform_4(%arg0: i32) -> (i32, i32) {
    %c0_i32 = arith.constant 0 : i32
    %c0_i32_0 = arith.constant 0 : i32
    %c0_i32_1 = arith.constant 0 : i32
    return %c0_i32, %c0_i32_0 : i32, i32
  }
  func.func @transform_5(%arg0: i32) -> (i32, i32) {
    %c0_i32 = arith.constant 0 : i32
    %c0_i32_0 = arith.constant 0 : i32
    return %arg0, %c0_i32 : i32, i32
  }
  func.func @transform_6(%arg0: i32) -> (i32, i32) {
    %c0_i32 = arith.constant 0 : i32
    %c0_i32_0 = arith.constant 0 : i32
    return %arg0, %c0_i32 : i32, i32
  }
}

</mosaic_0001>

<llo_original>
// kernel: tpu_custom_call.1
$region0: #{tpu_custom_call.1}
  #allocation0 [shape = 'u32[]', space=smem, size = 0x4, offset = 0x4, fixed_abs, tag = 'smem constant byte address 0x4 - core index']
  #allocation1 [shape = 'u32[144,128]{1,0:T(1,128)}', space=vmem, size = 0x12000, scoped, tag = 'internal scratch']
  %s0 = inlined_call_operand.hbm [shape: f32[8,32], index: 0, kind: input, shape index: {}]
  %s1 = inlined_call_operand.hbm [shape: f32[32,256], index: 1, kind: input, shape index: {}]
  %s2 = inlined_call_operand.vmem [shape: f32[1,256], index: 2, kind: input, shape index: {}]
  %s3 = inlined_call_operand.hbm [shape: f32[256,128], index: 3, kind: input, shape index: {}]
  %s4 = inlined_call_operand.vmem [shape: f32[1,128], index: 4, kind: input, shape index: {}]
  %s5 = inlined_call_operand.hbm [shape: f32[8,256], index: 5, kind: output, shape index: {0}]
  %s6 = inlined_call_operand.hbm [shape: f32[8,128], index: 6, kind: output, shape index: {1}]
  %7 = xla_tuple %s5, %s6
  %s8 = sld [smem:[#allocation0]]
  $region50: #{tpu_custom_call.1} parent=0
    _
  %s10 = ssub.s32 1, %s8
  %s11 = scalar_select 0, %s10, %s8
  $region1: #{tpu_custom_call.1} parent=0
    #allocation2 [shape = 'u8[4096]{0}', space=vmem, size = 0x1000, scoped, tag = 'input window, operand 0, single buffered']
    #allocation3 [shape = 's32[1]{0}', space=sflag, size = 0x4, scoped, tag = 'scoped memory for tpu_custom_call.1']
    #allocation4 [shape = 's32[1]{0}', space=sflag, size = 0x4, scoped, tag = 'scoped memory for tpu_custom_call.1']
    #allocation5 [shape = 'u8[32768]{0}', space=vmem, size = 0x8000, scoped, tag = 'input window, operand 1, single buffered']
    #allocation6 [shape = 's32[1]{0}', space=sflag, size = 0x4, scoped, tag = 'scoped memory for tpu_custom_call.1']
    #allocation7 [shape = 'u8[131072]{0}', space=vmem, size = 0x20000, scoped, tag = 'input window, operand 3, single buffered']
    #allocation8 [shape = 'u8[8192]{0}', space=vmem, size = 0x2000, scoped, tag = 'output window, operand 0, single buffered']
    #allocation9 [shape = 'u8[4096]{0}', space=vmem, size = 0x1000, scoped, tag = 'output window, operand 1, single buffered']
    #allocation10 [shape = 's32[1]{0}', space=sflag, size = 0x4, scoped, tag = 'scoped memory for tpu_custom_call.1']
    %12 = vsyncpa [#allocation3], 0
    %13 = vsyncpa [#allocation6], 0
    %14 = vsyncpa [#allocation4], 0
    %15 = vsyncpa [#allocation10], 0
    // Predicated region
    $region2: #{tpu_custom_call.1} parent=1 // pred_check
      _
    $region3: #{tpu_custom_call.1} parent=1 // pred_check_branch
      %17 = sbr.rel (0) target = $region5
    $region4: #{tpu_custom_call.1} parent=1 // pred_region
      %s19 = ssub.s32 128, 128
      %20 = vsyncadd [#allocation3], %s19
      %s22 = sshll.u32 [#allocation2], 4
      %s23 = int_to_ptr.vmem [resolvable:$true] %s22
      %25 = dma.hbm_to_vmem [thread:$0]  %s0, 128, %s23, [#allocation3]
    $region5: #{tpu_custom_call.1} parent=1 // pred_fallthru
      _
    // Predicated region
    $region6: #{tpu_custom_call.1} parent=1 // pred_check
      _
    $region7: #{tpu_custom_call.1} parent=1 // pred_check_branch
      %27 = sbr.rel (0) target = $region9
    $region8: #{tpu_custom_call.1} parent=1 // pred_region
      %s29 = ssub.s32 1024, 1024
      %30 = vsyncadd [#allocation6], %s29
      %s31 = sshll.u32 [#allocation5], 4
      %s32 = int_to_ptr.vmem [resolvable:$true] %s31
      %37 = dma.hbm_to_vmem [thread:$0]  %s1, 1024, %s32, [#allocation6], 256, 256, 16
    $region9: #{tpu_custom_call.1} parent=1 // pred_fallthru
      _
    // Predicated region
    $region10: #{tpu_custom_call.1} parent=1 // pred_check
      _
    $region11: #{tpu_custom_call.1} parent=1 // pred_check_branch
      %39 = sbr.rel (0) target = $region13
    $region12: #{tpu_custom_call.1} parent=1 // pred_region
      _
    $region13: #{tpu_custom_call.1} parent=1 // pred_fallthru
      _
    // Predicated region
    $region14: #{tpu_custom_call.1} parent=1 // pred_check
      _
    $region15: #{tpu_custom_call.1} parent=1 // pred_check_branch
      %41 = sbr.rel (0) target = $region17
    $region16: #{tpu_custom_call.1} parent=1 // pred_region
      %s43 = ssub.s32 4096, 4096
      %44 = vsyncadd [#allocation6], %s43
      %s45 = sshll.u32 [#allocation7], 4
      %s46 = int_to_ptr.vmem [resolvable:$true] %s45
      %51 = dma.hbm_to_vmem [thread:$0]  %s3, 4096, %s46, [#allocation6], 128, 128, 8
    $region17: #{tpu_custom_call.1} parent=1 // pred_fallthru
      _
    // Predicated region
    $region18: #{tpu_custom_call.1} parent=1 // pred_check
      _
    $region19: #{tpu_custom_call.1} parent=1 // pred_check_branch
      %53 = sbr.rel (0) target = $region21
    $region20: #{tpu_custom_call.1} parent=1 // pred_region
      _
    $region21: #{tpu_custom_call.1} parent=1 // pred_fallthru
      _
    // Predicated region
    $region22: #{tpu_custom_call.1} parent=1 // pred_check
      _
    $region23: #{tpu_custom_call.1} parent=1 // pred_check_branch
      %55 = sbr.rel (0) target = $region25
    $region24: #{tpu_custom_call.1} parent=1 // pred_region
      %56 = dma.done [#allocation3], 128
    $region25: #{tpu_custom_call.1} parent=1 // pred_fallthru
      _
    // Predicated region
    $region26: #{tpu_custom_call.1} parent=1 // pred_check
      _
    $region27: #{tpu_custom_call.1} parent=1 // pred_check_branch
      %58 = sbr.rel (0) target = $region29
    $region28: #{tpu_custom_call.1} parent=1 // pred_region
      %59 = dma.done [#allocation6], 1024
    $region29: #{tpu_custom_call.1} parent=1 // pred_fallthru
      _
    // Predicated region
    $region30: #{tpu_custom_call.1} parent=1 // pred_check
      _
    $region31: #{tpu_custom_call.1} parent=1 // pred_check_branch
      %61 = sbr.rel (0) target = $region33
    $region32: #{tpu_custom_call.1} parent=1 // pred_region
      %62 = dma.done [#allocation6], 4096
    $region33: #{tpu_custom_call.1} parent=1 // pred_fallthru
      _
    %v63 = vld [vmem:[#allocation2] sm:$0xff]
    %v64 = vld [vmem:[#allocation5] sm:$0xff]
    %v65 = vld [vmem:[#allocation5 + $0x8] sm:$0xff]
    %v66 = vld [vmem:[#allocation5 + $0x10] sm:$0xff]
    %v67 = vld [vmem:[#allocation5 + $0x18] sm:$0xff]
    %v68 = vld [vmem:[#allocation5 + $0x20] sm:$0xff]
    %v69 = vld [vmem:[#allocation5 + $0x28] sm:$0xff]
    %v70 = vld [vmem:[#allocation5 + $0x30] sm:$0xff]
    %v71 = vld [vmem:[#allocation5 + $0x38] sm:$0xff]
    %v72 = vld [vmem:[%s2] sm:$0x3]
    %v74 = vlaneseq
    %v75 = vshrl.u32 %v74, 7
    %v76 = vsub.s32 0, %v75
    %v77 = vrot.slane %v72, %v76
    %v78 = vlaneseq
    %v79 = vshrl.u32 %v78, 7
    %v80 = vsub.s32 1, %v79
    %v81 = vrot.slane %v72, %v80
    %vm84 = vcmask 261120
    %v86 = vsel %vm84, %v63, 0
    %88 = vmatprep.subr.mxu0 %v65
    %89 = vmatpush1.msra.mxu0 %v64
    %90 = vmatprep.subr.mxu0 %v67
    %91 = vmatpush1.msra.mxu0 %v66
    %92 = vmatprep.subr.mxu0 %v69
    %93 = vmatpush1.msra.mxu0 %v68
    %94 = vmatprep.subr.mxu0 %v71
    %95 = vmatpush1.msra.mxu0 %v70
    %96 = vmatprep.subr.mxu0 0.0
    %97 = vmatpush1.msra.mxu0 0.0
    %98 = vmatprep.subr.mxu0 0.0
    %99 = vmatpush1.msra.mxu0 0.0
    %100 = vmatprep.subr.mxu0 0.0
    %101 = vmatpush1.msra.mxu0 0.0
    %102 = vmatprep.subr.mxu0 0.0
    %103 = vmatpush1.msra.mxu0 0.0
    %104 = vmatprep.subr.mxu0 0.0
    %105 = vmatpush1.msra.mxu0 0.0
    %106 = vmatprep.subr.mxu0 0.0
    %107 = vmatpush1.msra.mxu0 0.0
    %108 = vmatprep.subr.mxu0 0.0
    %109 = vmatpush1.msra.mxu0 0.0
    %110 = vmatprep.subr.mxu0 0.0
    %111 = vmatpush1.msra.mxu0 0.0
    %112 = vmatprep.subr.mxu0 0.0
    %113 = vmatpush1.msra.mxu0 0.0
    %114 = vmatprep.subr.mxu0 0.0
    %115 = vmatpush1.msra.mxu0 0.0
    %116 = vmatprep.subr.mxu0 0.0
    %117 = vmatpush1.msra.mxu0 0.0
    %118 = vmatprep.subr.mxu0 0.0
    %119 = vmatpush1.msra.mxu0 0.0
    %120 = vmatprep.subr.mxu0 0.0
    %121 = vmatpush1.msra.mxu0 0.0
    %122 = vmatprep.subr.mxu0 0.0
    %123 = vmatpush1.msra.mxu0 0.0
    %124 = vmatprep.subr.mxu0 0.0
    %125 = vmatpush1.msra.mxu0 0.0
    %126 = vmatprep.subr.mxu0 0.0
    %127 = vmatpush1.msra.mxu0 0.0
    %128 = vmatprep.subr.mxu0 0.0
    %129 = vmatpush1.msra.mxu0 0.0
    %130 = vmatprep.subr.mxu0 0.0
    %131 = vmatpush1.msra.mxu0 0.0
    %132 = vmatprep.subr.mxu0 0.0
    %133 = vmatpush1.msra.mxu0 0.0
    %134 = vmatprep.subr.mxu0 0.0
    %135 = vmatpush1.msra.mxu0 0.0
    %136 = vmatprep.subr.mxu0 0.0
    %137 = vmatpush1.msra.mxu0 0.0
    %138 = vmatprep.subr.mxu0 0.0
    %139 = vmatpush1.msra.mxu0 0.0
    %140 = vmatprep.subr.mxu0 0.0
    %141 = vmatpush1.msra.mxu0 0.0
    %142 = vmatprep.subr.mxu0 0.0
    %143 = vmatpush1.msra.mxu0 0.0
    %144 = vmatprep.subr.mxu0 0.0
    %145 = vmatpush1.msra.mxu0 0.0
    %146 = vmatprep.subr.mxu0 0.0
    %147 = vmatpush1.msra.mxu0 0.0
    %148 = vmatprep.subr.mxu0 0.0
    %149 = vmatpush1.msra.mxu0 0.0
    %150 = vmatprep.subr.mxu0 0.0
    %151 = vmatpush1.msra.mxu0 0.0
    %152 = vmatprep.mubr.f32.mxu0 0.0
    %153 = vmatmul.mubr.f32.gmra.mrb[0].mxu0 %v86
    %v154 = vpop.f32.mrb[0].mxu0
    %v155 = vadd.f32 %v77, %v154
    %v156 = vpop.f32.mrb[0].mxu0
    %v157 = vadd.f32 %v81, %v156
    %158 = vdwg.mxu0
    %159 = vst [vmem:[#allocation8] sm:$0xff] %v155
    %160 = vst [vmem:[#allocation8 + $0x8] sm:$0xff] %v157
    %v161 = vld [vmem:[#allocation7] sm:$0xff]
    %v162 = vld [vmem:[#allocation7 + $0x8] sm:$0xff]
    %v163 = vld [vmem:[#allocation7 + $0x10] sm:$0xff]
    %v164 = vld [vmem:[#allocation7 + $0x18] sm:$0xff]
    %v165 = vld [vmem:[#allocation7 + $0x20] sm:$0xff]
    %v166 = vld [vmem:[#allocation7 + $0x28] sm:$0xff]
    %v167 = vld [vmem:[#allocation7 + $0x30] sm:$0xff]
    %v168 = vld [vmem:[#allocation7 + $0x38] sm:$0xff]
    %v169 = vld [vmem:[#allocation7 + $0x40] sm:$0xff]
    %v170 = vld [vmem:[#allocation7 + $0x48] sm:$0xff]
    %v171 = vld [vmem:[#allocation7 + $0x50] sm:$0xff]
    %v172 = vld [vmem:[#allocation7 + $0x58] sm:$0xff]
    %v173 = vld [vmem:[#allocation7 + $0x60] sm:$0xff]
    %v174 = vld [vmem:[#allocation7 + $0x68] sm:$0xff]
    %v175 = vld [vmem:[#allocation7 + $0x70] sm:$0xff]
    %v176 = vld [vmem:[#allocation7 + $0x78] sm:$0xff]
    %v177 = vld [vmem:[#allocation7 + $0x80] sm:$0xff]
    %v178 = vld [vmem:[#allocation7 + $0x88] sm:$0xff]
    %v179 = vld [vmem:[#allocation7 + $0x90] sm:$0xff]
    %v180 = vld [vmem:[#allocation7 + $0x98] sm:$0xff]
    %v181 = vld [vmem:[#allocation7 + $0xa0] sm:$0xff]
    %v182 = vld [vmem:[#allocation7 + $0xa8] sm:$0xff]
    %v183 = vld [vmem:[#allocation7 + $0xb0] sm:$0xff]
    %v184 = vld [vmem:[#allocation7 + $0xb8] sm:$0xff]
    %v185 = vld [vmem:[#allocation7 + $0xc0] sm:$0xff]
    %v186 = vld [vmem:[#allocation7 + $0xc8] sm:$0xff]
    %v187 = vld [vmem:[#allocation7 + $0xd0] sm:$0xff]
    %v188 = vld [vmem:[#allocation7 + $0xd8] sm:$0xff]
    %v189 = vld [vmem:[#allocation7 + $0xe0] sm:$0xff]
    %v190 = vld [vmem:[#allocation7 + $0xe8] sm:$0xff]
    %v191 = vld [vmem:[#allocation7 + $0xf0] sm:$0xff]
    %v192 = vld [vmem:[#allocation7 + $0xf8] sm:$0xff]
    %v193 = vld [vmem:[%s4] sm:$0x1]
    %v195 = vlaneseq
    %v196 = vshrl.u32 %v195, 7
    %v197 = vsub.s32 0, %v196
    %v198 = vrot.slane %v193, %v197
    %200 = vmatprep.subr.mxu0 0.0
    %201 = vmatpush1.msra.mxu0 %v161
    %202 = vmatprep.subr.mxu0 0.0
    %203 = vmatpush1.msra.mxu0 %v162
    %204 = vmatprep.subr.mxu0 0.0
    %205 = vmatpush1.msra.mxu0 %v163
    %206 = vmatprep.subr.mxu0 0.0
    %207 = vmatpush1.msra.mxu0 %v164
    %208 = vmatprep.subr.mxu0 0.0
    %209 = vmatpush1.msra.mxu0 %v165
    %210 = vmatprep.subr.mxu0 0.0
    %211 = vmatpush1.msra.mxu0 %v166
    %212 = vmatprep.subr.mxu0 0.0
    %213 = vmatpush1.msra.mxu0 %v167
    %214 = vmatprep.subr.mxu0 0.0
    %215 = vmatpush1.msra.mxu0 %v168
    %216 = vmatprep.subr.mxu0 0.0
    %217 = vmatpush1.msra.mxu0 %v169
    %218 = vmatprep.subr.mxu0 0.0
    %219 = vmatpush1.msra.mxu0 %v170
    %220 = vmatprep.subr.mxu0 0.0
    %221 = vmatpush1.msra.mxu0 %v171
    %222 = vmatprep.subr.mxu0 0.0
    %223 = vmatpush1.msra.mxu0 %v172
    %224 = vmatprep.subr.mxu0 0.0
    %225 = vmatpush1.msra.mxu0 %v173
    %226 = vmatprep.subr.mxu0 0.0
    %227 = vmatpush1.msra.mxu0 %v174
    %228 = vmatprep.subr.mxu0 0.0
    %229 = vmatpush1.msra.mxu0 %v175
    %230 = vmatprep.subr.mxu0 0.0
    %231 = vmatpush1.msra.mxu0 %v176
    %232 = vmatprep.subr.mxu0 0.0
    %233 = vmatpush1.msra.mxu0 %v177
    %234 = vmatprep.subr.mxu0 0.0
    %235 = vmatpush1.msra.mxu0 %v178
    %236 = vmatprep.subr.mxu0 0.0
    %237 = vmatpush1.msra.mxu0 %v179
    %238 = vmatprep.subr.mxu0 0.0
    %239 = vmatpush1.msra.mxu0 %v180
    %240 = vmatprep.subr.mxu0 0.0
    %241 = vmatpush1.msra.mxu0 %v181
    %242 = vmatprep.subr.mxu0 0.0
    %243 = vmatpush1.msra.mxu0 %v182
    %244 = vmatprep.subr.mxu0 0.0
    %245 = vmatpush1.msra.mxu0 %v183
    %246 = vmatprep.subr.mxu0 0.0
    %247 = vmatpush1.msra.mxu0 %v184
    %248 = vmatprep.subr.mxu0 0.0
    %249 = vmatpush1.msra.mxu0 %v185
    %250 = vmatprep.subr.mxu0 0.0
    %251 = vmatpush1.msra.mxu0 %v186
    %252 = vmatprep.subr.mxu0 0.0
    %253 = vmatpush1.msra.mxu0 %v187
    %254 = vmatprep.subr.mxu0 0.0
    %255 = vmatpush1.msra.mxu0 %v188
    %256 = vmatprep.subr.mxu0 0.0
    %257 = vmatpush1.msra.mxu0 %v189
    %258 = vmatprep.subr.mxu0 0.0
    %259 = vmatpush1.msra.mxu0 %v190
    %260 = vmatprep.subr.mxu0 0.0
    %261 = vmatpush1.msra.mxu0 %v191
    %262 = vmatprep.subr.mxu0 0.0
    %263 = vmatpush1.msra.mxu0 %v192
    %264 = vmatprep.mubr.f32.mxu0 %v157
    %265 = vmatmul.mubr.f32.gmra.mrb[0].mxu0 %v155
    %v266 = vpop.f32.mrb[0].mxu0
    %v267 = vadd.f32 %v198, %v266
    %v268 = vpop.f32.mrb[0].mxu0
    %269 = vdwg.mxu0
    %270 = vst [vmem:[#allocation9] sm:$0xff] %v267
    // Predicated region
    $region34: #{tpu_custom_call.1} parent=1 // pred_check
      _
    $region35: #{tpu_custom_call.1} parent=1 // pred_check_branch
      %272 = sbr.rel (0) target = $region37
    $region36: #{tpu_custom_call.1} parent=1 // pred_region
      %s274 = ssub.s32 256, 256
      %275 = vsyncadd [#allocation4], %s274
      %s277 = sshll.u32 [#allocation8], 4
      %s278 = int_to_ptr.vmem [resolvable:$true] %s277
      %280 = dma.vmem_to_hbm [thread:$0]  %s278, 256, %s5, [#allocation4]
    $region37: #{tpu_custom_call.1} parent=1 // pred_fallthru
      _
    // Predicated region
    $region38: #{tpu_custom_call.1} parent=1 // pred_check
      _
    $region39: #{tpu_custom_call.1} parent=1 // pred_check_branch
      %282 = sbr.rel (0) target = $region41
    $region40: #{tpu_custom_call.1} parent=1 // pred_region
      %s284 = ssub.s32 128, 128
      %285 = vsyncadd [#allocation10], %s284
      %s287 = sshll.u32 [#allocation9], 4
      %s288 = int_to_ptr.vmem [resolvable:$true] %s287
      %290 = dma.vmem_to_hbm [thread:$0]  %s288, 128, %s6, [#allocation10]
    $region41: #{tpu_custom_call.1} parent=1 // pred_fallthru
      _
    // Predicated region
    $region42: #{tpu_custom_call.1} parent=1 // pred_check
      _
    $region43: #{tpu_custom_call.1} parent=1 // pred_check_branch
      %292 = sbr.rel (0) target = $region45
    $region44: #{tpu_custom_call.1} parent=1 // pred_region
      %293 = dma.done [#allocation4], 256
    $region45: #{tpu_custom_call.1} parent=1 // pred_fallthru
      _
    // Predicated region
    $region46: #{tpu_custom_call.1} parent=1 // pred_check
      _
    $region47: #{tpu_custom_call.1} parent=1 // pred_check_branch
      %295 = sbr.rel (0) target = $region49
    $region48: #{tpu_custom_call.1} parent=1 // pred_region
      %296 = dma.done [#allocation10], 128
    $region49: #{tpu_custom_call.1} parent=1 // pred_fallthru
      _
    %297 = vsyncpa [#allocation3], 1
    %298 = vsyncpa [#allocation6], 1
    %299 = vsyncpa [#allocation4], 1
    %300 = vsyncpa [#allocation10], 1

</llo_original>
